<compile_context>
chip_gen: v6e
topology: v6e:2x2x1
jax: 0.10.0
libtpu: 0.0.40
codegen_flags: <defaults>
</compile_context>

<pallas_src>
import functools

import jax
import jax.numpy as jnp
from jax import lax
from jax.experimental import pallas as pl
from jax.experimental.pallas import tpu as pltpu


def _cluster_down_kernel(x_ref, lbl_ref, w_ref, b_ref, o_ref, *,
                         classes, ms, ms_pad, hw, tp, need_mask):
    """One (batch, pixel-tile) grid step, channel-major layout.

    x_ref  : (C_hs, TP)              float32 pixel features (cast to bf16 here)
    lbl_ref: (1, TP)                 int32   cluster label per pixel
    w_ref  : (classes*ms_pad, C_hs)  bf16    stacked per-class weights (8-row pad)
    b_ref  : (classes*ms_pad, 1)     float32 stacked per-class biases  (8-row pad)
    o_ref  : (ms, TP)                float32
    """
    lbl = lbl_ref[...]                                    # (1, TP), hoisted once
    xb = x_ref[...].astype(w_ref.dtype)                   # f32 -> bf16 in-kernel (free under DMA)

    # One fused MXU push for all classes (pre-activation, f32 accumulate).
    y = jnp.dot(w_ref[...], xb, preferred_element_type=jnp.float32)  # (classes*ms_pad, TP)
    b_all = b_ref[...]                                    # (classes*ms_pad, 1)

    if need_mask:                                         # ragged last tile only
        pix = pl.program_id(1) * tp + lax.broadcasted_iota(jnp.int32, (1, tp), 1)
        valid = pix < hw

    acc = jnp.zeros((ms_pad, tp), jnp.float32)            # selected pre-activation
    bsel = jnp.zeros((ms_pad, tp), jnp.float32)           # selected per-class bias
    for c in range(classes):                              # classes is small & static
        m = lbl == c
        if need_mask:
            m = jnp.logical_and(m, valid)
        acc = jnp.where(m, y[c * ms_pad:(c + 1) * ms_pad, :], acc)
        bsel = jnp.where(m, b_all[c * ms_pad:(c + 1) * ms_pad, :], bsel)

    out = jnp.maximum(acc + bsel, 0.0)                    # bias + ReLU once, on ms_pad rows
    o_ref[...] = out[:ms, :].astype(o_ref.dtype)


def cluster_down(image, clusters, weights, biases, *, classes,
                 tile_p=32768, out_dtype=jnp.float32):
    """image: (B, hs, H, W) f32; clusters: (B, 1, H, W) int;
    weights: (classes, ms, hs) (PyTorch nn.Linear layout); biases: (classes, ms).
    Returns (B, ms, H, W) in out_dtype (f32 by default, matching PyTorch)."""
    B, C_hs, H, W = image.shape
    C_ms = weights.shape[1]
    HW = H * W
    ms_pad = ((C_ms + 7) // 8) * 8                        # sublane-aligned class blocks

    # ---- pixel tile size: big, lane-dense, capped by an explicit VMEM budget ----
    hw128 = pl.cdiv(HW, 128) * 128
    bytes_per_px = (
        2 * C_hs * 4            # x f32 tile, double-buffered
        + 2 * 4                 # labels int32, double-buffered
        + 2 * C_ms * 4          # f32 output tile, double-buffered
        + C_hs * 2              # in-kernel bf16 cast of x
        + classes * ms_pad * 4  # stacked pre-activation y (f32)
        + 2 * ms_pad * 4)       # acc + selected-bias temps (f32)
    bytes_per_px = int(bytes_per_px * 1.25)               # headroom for compiler temps
    vmem_budget = 24 << 20                                # safe on v7x (64 MiB phys)
    tp_cap = max(128, (vmem_budget // bytes_per_px) // 128 * 128)
    tp = max(128, min((tile_p // 128) * 128, hw128, tp_cap))
    if B == 1 and hw128 >= 256:
        # v7x megacore: keep >=2 pixel tiles so the second TensorCore has work.
        tp = min(tp, max(128, pl.cdiv(pl.cdiv(HW, 2), 128) * 128))

    n_tiles = pl.cdiv(HW, tp)
    need_mask = (HW % tp) != 0                            # ragged last tile?

    # Reshapes are metadata-only (contiguous) — no extra HBM passes, no pad/slice.
    x = image.reshape(B, C_hs, HW)                        # stays f32; cast in-kernel
    lbl = clusters.reshape(B, 1, HW).astype(jnp.int32)    # int8 would save ~3-4% HBM; keep i32 for safety

    # Stack per-class Linear params, zero-padding each class block to ms_pad rows
    # so in-kernel per-class slices start on 8-row sublane boundaries.
    w_all = (jnp.zeros((classes, ms_pad, C_hs), jnp.bfloat16)
             .at[:, :C_ms, :].set(weights.astype(jnp.bfloat16))
             .reshape(classes * ms_pad, C_hs))
    b_all = (jnp.zeros((classes, ms_pad, 1), jnp.float32)
             .at[:, :C_ms, 0].set(biases.astype(jnp.float32))
             .reshape(classes * ms_pad, 1))

    kernel = functools.partial(_cluster_down_kernel, classes=classes, ms=C_ms,
                               ms_pad=ms_pad, hw=HW, tp=tp, need_mask=need_mask)
    out = pl.pallas_call(
        kernel,
        out_shape=jax.ShapeDtypeStruct((B, C_ms, HW), out_dtype),
        grid_spec=pltpu.PrefetchScalarGridSpec(
            num_scalar_prefetch=0,
            grid=(B, n_tiles),
            in_specs=[
                pl.BlockSpec((None, C_hs, tp), lambda b, p: (b, 0, p)),
                pl.BlockSpec((None, 1, tp), lambda b, p: (b, 0, p)),
                pl.BlockSpec((classes * ms_pad, C_hs), lambda b, p: (0, 0)),
                pl.BlockSpec((classes * ms_pad, 1), lambda b, p: (0, 0)),
            ],
            out_specs=pl.BlockSpec((None, C_ms, tp), lambda b, p: (b, 0, p)),
        ),
        compiler_params=pltpu.CompilerParams(
            dimension_semantics=("parallel", "parallel"),
            vmem_limit_bytes=32 * 1024 * 1024),
    )(x, lbl, w_all, b_all)

    return out.reshape(B, C_ms, H, W)


def _reference(image, clusters, weights, biases, classes):
    # Pure-JAX (f32) reference mirroring the PyTorch loop semantics.
    B, C_hs, H, W = image.shape
    C_ms = weights.shape[1]
    x = image.reshape(B, C_hs, H * W).astype(jnp.float32)
    lbl = clusters.reshape(B, 1, H * W)
    out = jnp.zeros((B, C_ms, H * W), jnp.float32)
    for c in range(classes):
        y = jnp.einsum('mh,bhp->bmp', weights[c].astype(jnp.float32), x)
        y = jnp.maximum(y + biases[c][None, :, None], 0.0)
        out = jnp.where(lbl == c, y, out)
    return out.reshape(B, C_ms, H, W)


if __name__ == "__main__":
    hs_channels = 32
    ms_channels = 4
    classes = 5

    key = jax.random.PRNGKey(0)
    k_img, k_cl, k_w, k_b, k_img2, k_cl2 = jax.random.split(key, 6)

    # Per-class Linear params in PyTorch layout: weight (ms, hs), bias (ms,).
    weights = 0.1 * jax.random.normal(
        k_w, (classes, ms_channels, hs_channels), dtype=jnp.float32)
    biases = 0.1 * jax.random.normal(k_b, (classes, ms_channels), dtype=jnp.float32)

    tol = 3e-2  # bf16 matmul vs f32 reference

    # --- Test 1: lane-aligned shape, multi-batch ---
    B, H, W = 2, 16, 16
    image = jax.random.normal(k_img, (B, hs_channels, H, W), dtype=jnp.float32)
    clusters = jax.random.randint(k_cl, (B, 1, H, W), 0, classes, dtype=jnp.int32)
    out = jax.block_until_ready(
        cluster_down(image, clusters, weights, biases, classes=classes))
    ref = _reference(image, clusters, weights, biases, classes)
    assert out.shape == (B, ms_channels, H, W)
    assert jnp.allclose(out, ref, atol=tol, rtol=tol)

    # --- Test 2: ragged pixel count (HW % 128 != 0), B=1, out-of-range labels ---
    B2, H2, W2 = 1, 12, 12
    image2 = jax.random.normal(k_img2, (B2, hs_channels, H2, W2), dtype=jnp.float32)
    clusters2 = jax.random.randint(
        k_cl2, (B2, 1, H2, W2), 0, classes + 2, dtype=jnp.int32)  # some labels unmatched -> zeros
    out2 = jax.block_until_ready(
        cluster_down(image2, clusters2, weights, biases, classes=classes))
    ref2 = _reference(image2, clusters2, weights, biases, classes)
    assert out2.shape == (B2, ms_channels, H2, W2)
    assert jnp.allclose(out2, ref2, atol=tol, rtol=tol)

    print("KERNEL_OK")
</pallas_src>

<mosaic_0001>
module attributes {stable_mosaic.version = 11 : i64} {
  func.func @_cluster_down_kernel(%arg0: i32, %arg1: i32, %arg2: memref<1x32x256xf32, #tpu.memory_space<vmem>>, %arg3: memref<1x1x256xi32, #tpu.memory_space<vmem>>, %arg4: memref<40x32xbf16, #tpu.memory_space<vmem>>, %arg5: memref<40x1xf32, #tpu.memory_space<vmem>>, %arg6: memref<1x4x256xf32, #tpu.memory_space<vmem>>) attributes {dimension_semantics = [#tpu.dimension_semantics<parallel>, #tpu.dimension_semantics<parallel>], iteration_bounds = array<i64: 2, 1>, scalar_prefetch = 0 : i64, scratch_operands = 0 : i64, tpu.core_type = #tpu.core_type<tc>, window_params = [{transform_indices = @transform_0, window_bounds = array<i64: 1, 32, 256>}, {transform_indices = @transform_1, window_bounds = array<i64: 1, 1, 256>}, {pipeline_mode = #tpu.pipeline_mode<synchronous>, transform_indices = @transform_2, window_bounds = array<i64: 40, 32>}, {pipeline_mode = #tpu.pipeline_mode<synchronous>, transform_indices = @transform_3, window_bounds = array<i64: 40, 1>}, {transform_indices = @transform_4, window_bounds = array<i64: 1, 4, 256>}]} {
    %c0 = arith.constant 0 : index
    %c0_0 = arith.constant 0 : index
    %c0_1 = arith.constant 0 : index
    %0 = vector.load %arg3[%c0, %c0_0, %c0_1] : memref<1x1x256xi32, #tpu.memory_space<vmem>>, vector<1x1x256xi32>
    %1 = vector.shape_cast %0 : vector<1x1x256xi32> to vector<1x256xi32>
    %c0_2 = arith.constant 0 : index
    %c0_3 = arith.constant 0 : index
    %c0_4 = arith.constant 0 : index
    %2 = vector.load %arg2[%c0_2, %c0_3, %c0_4] : memref<1x32x256xf32, #tpu.memory_space<vmem>>, vector<1x32x256xf32>
    %3 = vector.shape_cast %2 : vector<1x32x256xf32> to vector<32x256xf32>
    %4 = arith.truncf %3 : vector<32x256xf32> to vector<32x256xbf16>
    %c0_5 = arith.constant 0 : index
    %c0_6 = arith.constant 0 : index
    %5 = vector.load %arg4[%c0_5, %c0_6] : memref<40x32xbf16, #tpu.memory_space<vmem>>, vector<40x32xbf16>
    %cst = arith.constant dense<0.000000e+00> : vector<40x256xf32>
    %6 = tpu.matmul %5, %4, %cst {dimension_numbers = #tpu.dot_dimension_numbers<[1], [0], [0], [1], [0, 0, 1, 1], [], []>} : vector<40x32xbf16>, vector<32x256xbf16>, vector<40x256xf32> -> vector<40x256xf32>
    %c0_7 = arith.constant 0 : index
    %c0_8 = arith.constant 0 : index
    %7 = vector.load %arg5[%c0_7, %c0_8] : memref<40x1xf32, #tpu.memory_space<vmem>>, vector<40x1xf32>
    %cst_9 = arith.constant 0.000000e+00 : f32
    %8 = vector.broadcast %cst_9 : f32 to vector<8x256xf32>
    %cst_10 = arith.constant 0.000000e+00 : f32
    %9 = vector.broadcast %cst_10 : f32 to vector<8x256xf32>
    %c0_i32 = arith.constant 0 : i32
    %10 = vector.broadcast %c0_i32 : i32 to vector<1x256xi32>
    %11 = arith.cmpi eq, %1, %10 : vector<1x256xi32>
    %12 = vector.extract_strided_slice %6 {offsets = [0, 0], sizes = [8, 256], strides = [1, 1]} : vector<40x256xf32> to vector<8x256xf32>
    %13 = vector.shape_cast %11 : vector<1x256xi1> to vector<1x256xi1>
    %14 = vector.broadcast %13 : vector<1x256xi1> to vector<8x256xi1>
    %15 = arith.select %14, %12, %8 : vector<8x256xi1>, vector<8x256xf32>
    %16 = vector.extract_strided_slice %7 {offsets = [0, 0], sizes = [8, 1], strides = [1, 1]} : vector<40x1xf32> to vector<8x1xf32>
    %17 = vector.shape_cast %11 : vector<1x256xi1> to vector<1x256xi1>
    %18 = vector.broadcast %17 : vector<1x256xi1> to vector<8x256xi1>
    %19 = vector.shape_cast %16 : vector<8x1xf32> to vector<8x1xf32>
    %20 = vector.broadcast %19 : vector<8x1xf32> to vector<8x256xf32>
    %21 = arith.select %18, %20, %9 : vector<8x256xi1>, vector<8x256xf32>
    %c1_i32 = arith.constant 1 : i32
    %22 = vector.broadcast %c1_i32 : i32 to vector<1x256xi32>
    %23 = arith.cmpi eq, %1, %22 : vector<1x256xi32>
    %24 = vector.extract_strided_slice %6 {offsets = [8, 0], sizes = [8, 256], strides = [1, 1]} : vector<40x256xf32> to vector<8x256xf32>
    %25 = vector.shape_cast %23 : vector<1x256xi1> to vector<1x256xi1>
    %26 = vector.broadcast %25 : vector<1x256xi1> to vector<8x256xi1>
    %27 = arith.select %26, %24, %15 : vector<8x256xi1>, vector<8x256xf32>
    %28 = vector.extract_strided_slice %7 {offsets = [8, 0], sizes = [8, 1], strides = [1, 1]} : vector<40x1xf32> to vector<8x1xf32>
    %29 = vector.shape_cast %23 : vector<1x256xi1> to vector<1x256xi1>
    %30 = vector.broadcast %29 : vector<1x256xi1> to vector<8x256xi1>
    %31 = vector.shape_cast %28 : vector<8x1xf32> to vector<8x1xf32>
    %32 = vector.broadcast %31 : vector<8x1xf32> to vector<8x256xf32>
    %33 = arith.select %30, %32, %21 : vector<8x256xi1>, vector<8x256xf32>
    %c2_i32 = arith.constant 2 : i32
    %34 = vector.broadcast %c2_i32 : i32 to vector<1x256xi32>
    %35 = arith.cmpi eq, %1, %34 : vector<1x256xi32>
    %36 = vector.extract_strided_slice %6 {offsets = [16, 0], sizes = [8, 256], strides = [1, 1]} : vector<40x256xf32> to vector<8x256xf32>
    %37 = vector.shape_cast %35 : vector<1x256xi1> to vector<1x256xi1>
    %38 = vector.broadcast %37 : vector<1x256xi1> to vector<8x256xi1>
    %39 = arith.select %38, %36, %27 : vector<8x256xi1>, vector<8x256xf32>
    %40 = vector.extract_strided_slice %7 {offsets = [16, 0], sizes = [8, 1], strides = [1, 1]} : vector<40x1xf32> to vector<8x1xf32>
    %41 = vector.shape_cast %35 : vector<1x256xi1> to vector<1x256xi1>
    %42 = vector.broadcast %41 : vector<1x256xi1> to vector<8x256xi1>
    %43 = vector.shape_cast %40 : vector<8x1xf32> to vector<8x1xf32>
    %44 = vector.broadcast %43 : vector<8x1xf32> to vector<8x256xf32>
    %45 = arith.select %42, %44, %33 : vector<8x256xi1>, vector<8x256xf32>
    %c3_i32 = arith.constant 3 : i32
    %46 = vector.broadcast %c3_i32 : i32 to vector<1x256xi32>
    %47 = arith.cmpi eq, %1, %46 : vector<1x256xi32>
    %48 = vector.extract_strided_slice %6 {offsets = [24, 0], sizes = [8, 256], strides = [1, 1]} : vector<40x256xf32> to vector<8x256xf32>
    %49 = vector.shape_cast %47 : vector<1x256xi1> to vector<1x256xi1>
    %50 = vector.broadcast %49 : vector<1x256xi1> to vector<8x256xi1>
    %51 = arith.select %50, %48, %39 : vector<8x256xi1>, vector<8x256xf32>
    %52 = vector.extract_strided_slice %7 {offsets = [24, 0], sizes = [8, 1], strides = [1, 1]} : vector<40x1xf32> to vector<8x1xf32>
    %53 = vector.shape_cast %47 : vector<1x256xi1> to vector<1x256xi1>
    %54 = vector.broadcast %53 : vector<1x256xi1> to vector<8x256xi1>
    %55 = vector.shape_cast %52 : vector<8x1xf32> to vector<8x1xf32>
    %56 = vector.broadcast %55 : vector<8x1xf32> to vector<8x256xf32>
    %57 = arith.select %54, %56, %45 : vector<8x256xi1>, vector<8x256xf32>
    %c4_i32 = arith.constant 4 : i32
    %58 = vector.broadcast %c4_i32 : i32 to vector<1x256xi32>
    %59 = arith.cmpi eq, %1, %58 : vector<1x256xi32>
    %60 = vector.extract_strided_slice %6 {offsets = [32, 0], sizes = [8, 256], strides = [1, 1]} : vector<40x256xf32> to vector<8x256xf32>
    %61 = vector.shape_cast %59 : vector<1x256xi1> to vector<1x256xi1>
    %62 = vector.broadcast %61 : vector<1x256xi1> to vector<8x256xi1>
    %63 = arith.select %62, %60, %51 : vector<8x256xi1>, vector<8x256xf32>
    %64 = vector.extract_strided_slice %7 {offsets = [32, 0], sizes = [8, 1], strides = [1, 1]} : vector<40x1xf32> to vector<8x1xf32>
    %65 = vector.shape_cast %59 : vector<1x256xi1> to vector<1x256xi1>
    %66 = vector.broadcast %65 : vector<1x256xi1> to vector<8x256xi1>
    %67 = vector.shape_cast %64 : vector<8x1xf32> to vector<8x1xf32>
    %68 = vector.broadcast %67 : vector<8x1xf32> to vector<8x256xf32>
    %69 = arith.select %66, %68, %57 : vector<8x256xi1>, vector<8x256xf32>
    %70 = arith.addf %63, %69 : vector<8x256xf32>
    %cst_11 = arith.constant 0.000000e+00 : f32
    %71 = vector.broadcast %cst_11 : f32 to vector<8x256xf32>
    %72 = arith.maximumf %70, %71 : vector<8x256xf32>
    %73 = vector.extract_strided_slice %72 {offsets = [0, 0], sizes = [4, 256], strides = [1, 1]} : vector<8x256xf32> to vector<4x256xf32>
    %c0_12 = arith.constant 0 : index
    %c0_13 = arith.constant 0 : index
    %c0_14 = arith.constant 0 : index
    %74 = vector.load %arg6[%c0_12, %c0_13, %c0_14] : memref<1x4x256xf32, #tpu.memory_space<vmem>>, vector<1x4x256xf32>
    %75 = vector.shape_cast %74 : vector<1x4x256xf32> to vector<4x256xf32>
    %76 = vector.shape_cast %73 : vector<4x256xf32> to vector<1x4x256xf32>
    tpu.vector_store %arg6[%c0_12, %c0_13, %c0_14], %76 {strides = array<i32>} : memref<1x4x256xf32, #tpu.memory_space<vmem>>, vector<1x4x256xf32>,
    return
  }
  func.func @transform_0(%arg0: i32, %arg1: i32) -> (i32, i32, i32) {
    %c0_i32 = arith.constant 0 : i32
    %c0_i32_0 = arith.constant 0 : i32
    return %arg0, %c0_i32, %arg1 : i32, i32, i32
  }
  func.func @transform_1(%arg0: i32, %arg1: i32) -> (i32, i32, i32) {
    %c0_i32 = arith.constant 0 : i32
    %c0_i32_0 = arith.constant 0 : i32
    return %arg0, %c0_i32, %arg1 : i32, i32, i32
  }
  func.func @transform_2(%arg0: i32, %arg1: i32) -> (i32, i32) {
    %c0_i32 = arith.constant 0 : i32
    %c0_i32_0 = arith.constant 0 : i32
    %c0_i32_1 = arith.constant 0 : i32
    return %c0_i32, %c0_i32_0 : i32, i32
  }
  func.func @transform_3(%arg0: i32, %arg1: i32) -> (i32, i32) {
    %c0_i32 = arith.constant 0 : i32
    %c0_i32_0 = arith.constant 0 : i32
    %c0_i32_1 = arith.constant 0 : i32
    return %c0_i32, %c0_i32_0 : i32, i32
  }
  func.func @transform_4(%arg0: i32, %arg1: i32) -> (i32, i32, i32) {
    %c0_i32 = arith.constant 0 : i32
    %c0_i32_0 = arith.constant 0 : i32
    return %arg0, %c0_i32, %arg1 : i32, i32, i32
  }
}

</mosaic_0001>

<llo_original>
// kernel: tpu_custom_call.1
$region0: #{tpu_custom_call.1}
  #allocation0 [shape = 'u32[]', space=smem, size = 0x4, offset = 0x4, fixed_abs, tag = 'smem constant byte address 0x4 - core index']
  #allocation1 [shape = 'u32[144,128]{1,0:T(1,128)}', space=vmem, size = 0x12000, scoped, tag = 'internal scratch']
  %s0 = inlined_call_operand.hbm [shape: f32[2,32,256], index: 0, kind: input, shape index: {}]
  %s1 = inlined_call_operand.vmem [shape: s32[2,1,256], index: 1, kind: input, shape index: {}]
  %s2 = inlined_call_operand.vmem [shape: bf16[40,32], index: 2, kind: input, shape index: {}]
  %s3 = inlined_call_operand.vmem [shape: f32[40,1], index: 3, kind: input, shape index: {}]
  %s4 = inlined_call_operand.hbm [shape: f32[2,4,256], index: 4, kind: output, shape index: {}]
  %s5 = sld [smem:[#allocation0]]
  $region53: #{tpu_custom_call.1} parent=0
    _
  %s7 = ssub.s32 1, %s5
  %s8 = scalar_select 0, %s7, %s5
  $region1: #{tpu_custom_call.1} parent=0
    #allocation2 [shape = 'u8[65536]{0}', space=vmem, size = 0x10000, scoped, tag = 'input window, operand 0']
    #allocation3 [shape = 's32[2]{0}', space=sflag, size = 0x8, scoped, tag = 'scoped memory for tpu_custom_call.1']
    #allocation4 [shape = 's32[2]{0}', space=sflag, size = 0x8, scoped, tag = 'scoped memory for tpu_custom_call.1']
    #allocation5 [shape = 'u8[8192]{0}', space=vmem, size = 0x2000, scoped, tag = 'output window, operand 0']
    %9 = vsyncpa [#allocation3], 0
    %s10 = scalar_lea.sflag [#allocation3], 1
    %11 = vsyncpa %s10, 0
    %12 = vsyncpa [#allocation4], 0
    %s13 = scalar_lea.sflag [#allocation4], 1
    %14 = vsyncpa %s13, 0
    loop: start=0, step=1, limit=4
    $region2: #{tpu_custom_call.1} parent=1 // loop_pre_header
      _
    $region3: #{tpu_custom_call.1} parent=1 // loop_header
      %s16 = sphi 0, %s20
      %p17 = scmp.ge.s32.totalorder %s16, 4
      %s23 = sphi 0, %s35
      %s24 = sphi 0, %s31
      %s25 = sphi 0, %s23
      %s26 = sphi 0, %s24
      %s27 = sphi 0, %s25
      %s28 = sphi 0, %s26
      %s40 = sphi 0, %s42
      %s43 = sphi 0, %s40
      %s44 = sphi 0, %s43
      %s60 = sphi 0, %s44
      %s68 = sphi 0, %s70
      %s71 = sphi 0, %s68
      %s72 = sphi 0, %s71
      %s88 = sphi 0, %s72
      %s92 = sphi 0, %s92
      %s94 = sphi 0, %s92
      %s95 = sphi 0, %s94
      %s109 = sphi 0, %s95
      %s113 = sphi 0, %s113
      %s115 = sphi 0, %s113
      %s116 = sphi 0, %s115
      %s130 = sphi 0, %s116
      %s138 = sphi 0, %s140
      %s141 = sphi 0, %s138
      %s142 = sphi 0, %s141
      %s158 = sphi 0, %s142
    $region4: #{tpu_custom_call.1} parent=1 // loop_header_branch
      %19 = sbr.rel (%p17) target = $region8
    $region5: #{tpu_custom_call.1} parent=1 // loop_body
      %s21 = ssub.s32 %s16, 1
      %s22 = ssub.s32 %s16, 2
      %s29 = sadd.s32 1, %s24
      %p30 = scmp.ge.s32.totalorder %s29, 1
      %s31 = scalar_select %p30, 0, %s29
      %s32 = sadd.s32 1, %s23
      %s33 = scalar_select %p30, %s32, %s23
      %p34 = scmp.ge.s32.totalorder %s33, 2
      %s35 = scalar_select %p34, 0, %s33
      %s36 = ssub.s32 %s23, %s35
      %s37 = ssub.s32 %s24, %s31
      %s38 = sor.u32 %s36, %s37
      %p39 = scmp.eq.s32.totalorder %s38, 0
      %s41 = sadd.s32 %s40, 1
      %s42 = scalar_select %p39, %s40, %s41
      %p45 = pneg %p39
      %p46 = scmp.eq.s32.totalorder %s16, 1
      %p47 = por %p45, %p46
      %p48 = scmp.ne.s32.totalorder %s40, %s43
      %p49 = scmp.eq.s32.totalorder %s16, 0
      %p50 = por %p48, %p49
      %p51 = scmp.ne.s32.totalorder %s40, %s43
      %p52 = scmp.eq.s32.totalorder %s21, 1
      %p53 = por %p51, %p52
      %p54 = scmp.ne.s32.totalorder %s43, %s44
      %p55 = scmp.eq.s32.totalorder %s21, 0
      %p56 = por %p54, %p55
      %p57 = scmp.ne.s32.totalorder %s43, %s44
      %p58 = scmp.eq.s32.totalorder %s22, 1
      %p59 = por %p57, %p58
      %p61 = scmp.ne.s32.totalorder %s44, %s60
      %p62 = scmp.eq.s32.totalorder %s22, 0
      %p63 = por %p61, %p62
      %s64 = ssub.s32 %s23, %s35
      %s65 = ssub.s32 %s24, %s31
      %s66 = sor.u32 %s64, %s65
      %p67 = scmp.eq.s32.totalorder %s66, 0
      %s69 = sadd.s32 %s68, 1
      %s70 = scalar_select %p67, %s68, %s69
      %p73 = pneg %p67
      %p74 = scmp.eq.s32.totalorder %s16, 1
      %p75 = por %p73, %p74
      %p76 = scmp.ne.s32.totalorder %s68, %s71
      %p77 = scmp.eq.s32.totalorder %s16, 0
      %p78 = por %p76, %p77
      %p79 = scmp.ne.s32.totalorder %s68, %s71
      %p80 = scmp.eq.s32.totalorder %s21, 1
      %p81 = por %p79, %p80
      %p82 = scmp.ne.s32.totalorder %s71, %s72
      %p83 = scmp.eq.s32.totalorder %s21, 0
      %p84 = por %p82, %p83
      %p85 = scmp.ne.s32.totalorder %s71, %s72
      %p86 = scmp.eq.s32.totalorder %s22, 1
      %p87 = por %p85, %p86
      %p89 = scmp.ne.s32.totalorder %s72, %s88
      %p90 = scmp.eq.s32.totalorder %s22, 0
      %p91 = por %p89, %p90
      %s93 = sadd.s32 %s92, 1
      %p96 = scmp.eq.s32.totalorder %s16, 1
      %p97 = scmp.ne.s32.totalorder %s92, %s94
      %p98 = scmp.eq.s32.totalorder %s16, 0
      %p99 = por %p97, %p98
      %p100 = scmp.ne.s32.totalorder %s92, %s94
      %p101 = scmp.eq.s32.totalorder %s21, 1
      %p102 = por %p100, %p101
      %p103 = scmp.ne.s32.totalorder %s94, %s95
      %p104 = scmp.eq.s32.totalorder %s21, 0
      %p105 = por %p103, %p104
      %p106 = scmp.ne.s32.totalorder %s94, %s95
      %p107 = scmp.eq.s32.totalorder %s22, 1
      %p108 = por %p106, %p107
      %p110 = scmp.ne.s32.totalorder %s95, %s109
      %p111 = scmp.eq.s32.totalorder %s22, 0
      %p112 = por %p110, %p111
      %s114 = sadd.s32 %s113, 1
      %p117 = scmp.eq.s32.totalorder %s16, 1
      %p118 = scmp.ne.s32.totalorder %s113, %s115
      %p119 = scmp.eq.s32.totalorder %s16, 0
      %p120 = por %p118, %p119
      %p121 = scmp.ne.s32.totalorder %s113, %s115
      %p122 = scmp.eq.s32.totalorder %s21, 1
      %p123 = por %p121, %p122
      %p124 = scmp.ne.s32.totalorder %s115, %s116
      %p125 = scmp.eq.s32.totalorder %s21, 0
      %p126 = por %p124, %p125
      %p127 = scmp.ne.s32.totalorder %s115, %s116
      %p128 = scmp.eq.s32.totalorder %s22, 1
      %p129 = por %p127, %p128
      %p131 = scmp.ne.s32.totalorder %s116, %s130
      %p132 = scmp.eq.s32.totalorder %s22, 0
      %p133 = por %p131, %p132
      %s134 = ssub.s32 %s23, %s35
      %s135 = ssub.s32 %s24, %s31
      %s136 = sor.u32 %s134, %s135
      %p137 = scmp.eq.s32.totalorder %s136, 0
      %s139 = sadd.s32 %s138, 1
      %s140 = scalar_select %p137, %s138, %s139
      %p143 = pneg %p137
      %p144 = scmp.eq.s32.totalorder %s16, 1
      %p145 = por %p143, %p144
      %p146 = scmp.ne.s32.totalorder %s138, %s141
      %p147 = scmp.eq.s32.totalorder %s16, 0
      %p148 = por %p146, %p147
      %p149 = scmp.ne.s32.totalorder %s138, %s141
      %p150 = scmp.eq.s32.totalorder %s21, 1
      %p151 = por %p149, %p150
      %p152 = scmp.ne.s32.totalorder %s141, %s142
      %p153 = scmp.eq.s32.totalorder %s21, 0
      %p154 = por %p152, %p153
      %p155 = scmp.ne.s32.totalorder %s141, %s142
      %p156 = scmp.eq.s32.totalorder %s22, 1
      %p157 = por %p155, %p156
      %p159 = scmp.ne.s32.totalorder %s142, %s158
      %p160 = scmp.eq.s32.totalorder %s22, 0
      %p161 = por %p159, %p160
      %p162 = scmp.le.s32.totalorder 1, %s16
      %p163 = scmp.lt.s32.totalorder %s16, 3
      %p164 = pnand %p162, %p163
      %p165 = pneg %p164
      // Predicated region
      $region9: #{tpu_custom_call.1} parent=5 // pred_check
        _
      $region10: #{tpu_custom_call.1} parent=5 // pred_check_branch
        %167 = sbr.rel (%p164) target = $region12
      $region11: #{tpu_custom_call.1} parent=5 // pred_region
        %s168 = ssub.s32 %s16, 1
        // Predicated region
        $region13: #{tpu_custom_call.1} parent=11 // pred_check
          %p169 = pneg %p105
        $region14: #{tpu_custom_call.1} parent=11 // pred_check_branch
          %171 = sbr.rel (%p169) target = $region16
        $region15: #{tpu_custom_call.1} parent=11 // pred_region
          _
        $region16: #{tpu_custom_call.1} parent=11 // pred_fallthru
          _
        // Predicated region
        $region17: #{tpu_custom_call.1} parent=11 // pred_check
          %p172 = pneg %p126
        $region18: #{tpu_custom_call.1} parent=11 // pred_check_branch
          %174 = sbr.rel (%p172) target = $region20
        $region19: #{tpu_custom_call.1} parent=11 // pred_region
          _
        $region20: #{tpu_custom_call.1} parent=11 // pred_fallthru
          _
      $region12: #{tpu_custom_call.1} parent=5 // pred_fallthru
        _
      %p175 = scmp.lt.s32.totalorder %s16, 2
      // Predicated region
      $region21: #{tpu_custom_call.1} parent=5 // pred_check
        %p176 = pneg %p175
      $region22: #{tpu_custom_call.1} parent=5 // pred_check_branch
        %178 = sbr.rel (%p176) target = $region24
      $region23: #{tpu_custom_call.1} parent=5 // pred_region
        // Predicated region
        $region25: #{tpu_custom_call.1} parent=23 // pred_check
          %p179 = pneg %p50
        $region26: #{tpu_custom_call.1} parent=23 // pred_check_branch
          %181 = sbr.rel (%p179) target = $region28
        $region27: #{tpu_custom_call.1} parent=23 // pred_region
          %s182 = sand.u32 %s40, 1
          %s183 = scalar_lea.sflag [#allocation3], %s182
          %s184 = sand.u32 %s40, 1
          %s185 = smul.addr %s184, 64
          %s186 = scalar_lea.vmem [#allocation2], %s185
          %s187 = smul.u32 2, %s24
          %s189 = ssub.s32 1024, 1024
          %190 = vsyncadd %s183, %s189
          %s191 = smul.addr %s23, 8
          %s192 = sadd.s32 %s187, %s191
          %s193 = smul.addr %s192, 128
          %s194 = scalar_lea.hbm %s0, %s193
          %s195 = sshll.u32 %s186, 4
          %s196 = int_to_ptr.vmem [resolvable:$true] %s195
          %201 = dma.hbm_to_vmem [thread:$0]  %s194, 1024, %s196, %s183, 256, 256, 16
        $region28: #{tpu_custom_call.1} parent=23 // pred_fallthru
          _
        // Predicated region
        $region29: #{tpu_custom_call.1} parent=23 // pred_check
          %p202 = pneg %p78
        $region30: #{tpu_custom_call.1} parent=23 // pred_check_branch
          %204 = sbr.rel (%p202) target = $region32
        $region31: #{tpu_custom_call.1} parent=23 // pred_region
          %s205 = smul.u32 2, %s24
          %p206 = scmp.lt.s32.totalorder %s23, 1
          %s207 = scalar_select %p206, %s23, 1
          %p208 = scmp.lt.s32.totalorder %s205, 1
          %s209 = scalar_select %p208, %s205, 1
          %s210 = smul.addr %s207, 2
          %s211 = sadd.s32 %s209, %s210
          %s212 = scalar_lea.vmem %s1, %s211
          %s213 = smul.u32 2, %s24
        $region32: #{tpu_custom_call.1} parent=23 // pred_fallthru
          _
      $region24: #{tpu_custom_call.1} parent=5 // pred_fallthru
        _
      %p214 = scmp.le.s32.totalorder 1, %s16
      %p215 = scmp.lt.s32.totalorder %s16, 3
      %p216 = pnand %p214, %p215
      %p217 = pneg %p216
      // Predicated region
      $region33: #{tpu_custom_call.1} parent=5 // pred_check
        _
      $region34: #{tpu_custom_call.1} parent=5 // pred_check_branch
        %219 = sbr.rel (%p216) target = $region36
      $region35: #{tpu_custom_call.1} parent=5 // pred_region
        %s220 = ssub.s32 %s16, 1
        %s221 = sand.u32 %s43, 1
        %s222 = scalar_lea.sflag [#allocation3], %s221
        %s223 = sand.u32 %s43, 1
        %s224 = smul.addr %s223, 64
        %s225 = scalar_lea.vmem [#allocation2], %s224
        // Predicated region
        $region37: #{tpu_custom_call.1} parent=35 // pred_check
          %p226 = pneg %p56
        $region38: #{tpu_custom_call.1} parent=35 // pred_check_branch
          %228 = sbr.rel (%p226) target = $region40
        $region39: #{tpu_custom_call.1} parent=35 // pred_region
          %229 = dma.done %s222, 1024
        $region40: #{tpu_custom_call.1} parent=35 // pred_fallthru
          _
        %s230 = sand.u32 %s43, 1
        %s231 = scalar_lea.sflag [#allocation3], %s230
        %s232 = sand.u32 %s43, 1
        %s233 = smul.addr %s232, 64
        %s234 = scalar_lea.vmem [#allocation2], %s233
        %p235 = pneg %p56
        %p236 = pneg %p53
        %s237 = smul.u32 2, %s26
        %p238 = scmp.lt.s32.totalorder %s25, 1
        %s239 = scalar_select %p238, %s25, 1
        %p240 = scmp.lt.s32.totalorder %s237, 1
        %s241 = scalar_select %p240, %s237, 1
        %s242 = smul.addr %s239, 2
        %s243 = sadd.s32 %s241, %s242
        %s244 = scalar_lea.vmem %s1, %s243
        %p245 = pneg %p84
        %p246 = pneg %p81
        %p247 = pneg %p105
        %p248 = pneg %p102
        %p249 = pneg %p126
        %p250 = pneg %p123
        %p251 = pneg %p154
        %p252 = pneg %p151
        %s253 = sand.u32 %s141, 1
        %s254 = scalar_lea.sflag [#allocation4], %s253
        %s255 = sand.u32 %s141, 1
        %s256 = smul.addr %s255, 8
        %s257 = scalar_lea.vmem [#allocation5], %s256
        %s258 = smul.u32 2, %s26
        %s259 = smul.u32 2, %s26
        %p260 = scmp.lt.s32.totalorder %s25, 1
        %s261 = scalar_select %p260, %s25, 1
        %p262 = scmp.lt.s32.totalorder %s259, 1
        %s263 = scalar_select %p262, %s259, 1
        %s264 = smul.addr %s261, 2
        %s265 = sadd.s32 %s263, %s264
        %s266 = scalar_lea.vmem %s1, %s265
        %s267 = smul.u32 2, %s26
        %s268 = smul.u32 2, %s26
        %v270 = vld [vmem:[%s266] sm:$0x3]
        %v271 = vld [vmem:[%s225] sm:$0xff]
        %v272 = vld [vmem:[%s225 + $0x8] sm:$0xff]
        %v273 = vld [vmem:[%s225 + $0x10] sm:$0xff]
        %v274 = vld [vmem:[%s225 + $0x18] sm:$0xff]
        %v275 = vld [vmem:[%s225 + $0x20] sm:$0xff]
        %v276 = vld [vmem:[%s225 + $0x28] sm:$0xff]
        %v277 = vld [vmem:[%s225 + $0x30] sm:$0xff]
        %v278 = vld [vmem:[%s225 + $0x38] sm:$0xff]
        %v279 = vpack.c.bf16 %v273, %v271
        %v280 = vpack.c.bf16 %v274, %v272
        %v281 = vpack.c.bf16 %v277, %v275
        %v282 = vpack.c.bf16 %v278, %v276
        %v283 = vld [vmem:[%s2] sm:$0xf]
        %v284 = vld [vmem:[%s2 + $0x4] sm:$0xf]
        %v285 = vld [vmem:[%s2 + $0x8] sm:$0xf]
        %v286 = vld [vmem:[%s2 + $0xc] sm:$0xf]
        %v287 = vld [vmem:[%s2 + $0x10] sm:$0xf]
        %v293 = vunpack.c.l.b16 %v283
        %v294 = vunpack.c.l.b16 %v284
        %v295 = vunpack.c.l.b16 %v285
        %v296 = vunpack.c.l.b16 %v286
        %v297 = vunpack.c.l.b16 %v287
        %v298 = vpack.c.b16 %v294, %v293
        %v299 = vpack.c.b16 %v296, %v295
        %v300 = vpack.c.b16 %v297, %v297
        %vm301 = vcmask 261120
        %v303 = vsel %vm301, %v298, 0
        %v306 = vsel %vm301, %v299, 0
        %v309 = vsel %vm301, %v300, 0
        %311 = vmatprep.subr.bf16.mxu0 0
        %312 = vmatpush1.bf16.msra.mxu0 0
        %313 = vmatprep.subr.bf16.mxu0 0
        %314 = vmatpush1.bf16.msra.mxu0 0
        %315 = vmatprep.subr.bf16.mxu0 0
        %316 = vmatpush1.bf16.msra.mxu0 0
        %317 = vmatprep.subr.bf16.mxu0 0
        %318 = vmatpush1.bf16.msra.mxu0 0
        %319 = vmatprep.subr.bf16.mxu0 0
        %320 = vmatpush1.bf16.msra.mxu0 0
        %321 = vmatprep.subr.bf16.mxu0 0
        %322 = vmatpush1.bf16.msra.mxu0 0
        %323 = vmatprep.subr.bf16.mxu0 %v282
        %324 = vmatpush1.bf16.msra.mxu0 %v281
        %325 = vmatprep.subr.bf16.mxu0 %v280
        %326 = vmatpush1.bf16.msra.mxu0 %v279
        %327 = vmatprep.subr.bf16.mxu0 0
        %328 = vmatpush2.bf16.msra.mxu0 0
        %329 = vmatprep.subr.bf16.mxu0 0
        %330 = vmatpush2.bf16.msra.mxu0 0
        %331 = vmatprep.subr.bf16.mxu0 0
        %332 = vmatpush2.bf16.msra.mxu0 0
        %333 = vmatprep.subr.bf16.mxu0 0
        %334 = vmatpush2.bf16.msra.mxu0 0
        %335 = vmatprep.subr.bf16.mxu0 0
        %336 = vmatpush2.bf16.msra.mxu0 0
        %337 = vmatprep.subr.bf16.mxu0 0
        %338 = vmatpush2.bf16.msra.mxu0 0
        %339 = vmatprep.subr.bf16.mxu0 0
        %340 = vmatpush2.bf16.msra.mxu0 0
        %341 = vmatprep.subr.bf16.mxu0 0
        %342 = vmatpush2.bf16.msra.mxu0 0
        %343 = vmatprep.mubr.bf16.mxu0 0
        %344 = vmatmul.mubr.bf16.gmra.mxu0 %v303
        %v345 = vpop.f32.mrf.mxu0
        %v346 = vadd.f32 0.0, %v345
        %v347 = vpop.f32.mrf.mxu0
        %v348 = vadd.f32 0.0, %v347
        %v349 = vpop.f32.mrf.mxu0
        %v350 = vadd.f32 0.0, %v349
        %v351 = vpop.f32.mrf.mxu0
        %v352 = vadd.f32 0.0, %v351
        %353 = vmatprep.mubr.bf16.mxu0 0
        %354 = vmatmul.mubr.bf16.gmra.mxu0 %v306
        %v355 = vpop.f32.mrf.mxu0
        %v356 = vadd.f32 0.0, %v355
        %v357 = vpop.f32.mrf.mxu0
        %v358 = vadd.f32 0.0, %v357
        %v359 = vpop.f32.mrf.mxu0
        %v360 = vadd.f32 0.0, %v359
        %v361 = vpop.f32.mrf.mxu0
        %v362 = vadd.f32 0.0, %v361
        %363 = vmatprep.mubr.bf16.mxu0 0
        %364 = vmatmul.mubr.bf16.gmra.mxu0 %v309
        %v365 = vpop.f32.mrf.mxu0
        %v366 = vadd.f32 0.0, %v365
        %v367 = vpop.f32.mrf.mxu0
        %v368 = vadd.f32 0.0, %v367
        %v369 = vpop.f32.mrf.mxu0
        %v370 = vpop.f32.mrf.mxu0
        %371 = vdwg.mxu0
        %v372 = vld [vmem:[%s3] sm:$0xff]
        %v373 = vld [vmem:[%s3 + $0x8] sm:$0xff]
        %v374 = vld [vmem:[%s3 + $0x10] sm:$0xff]
        %v375 = vld [vmem:[%s3 + $0x18] sm:$0xff]
        %v376 = vld [vmem:[%s3 + $0x20] sm:$0xff]
        %vm377 = vcmp.eq.s32.totalorder %v270, 0
        %v378 = vsel %vm377, 1, 0
        %v379 = vlaneseq
        %v380 = vshrl.u32 %v379, 7
        %v381 = vsub.s32 0, %v380
        %v382 = vrot.slane %v378, %v381
        %v383 = vlaneseq
        %v384 = vshrl.u32 %v383, 7
        %v385 = vsub.s32 1, %v384
        %v386 = vrot.slane %v378, %v385
        %vm387 = vcmp.eq.s32.totalorder %v382, 1
        %vm388 = vcmp.eq.s32.totalorder %v386, 1
        %v389 = vsel %vm387, %v346, 0.0
        %v390 = vsel %vm388, %v348, 0.0
        %392 = vset.pattern.permute.xlu0 0
        %393 = vperm.xlu0 %392, %v372
        %v394 = vpop.permute.xlu0 %393
        %v396 = vsel %vm387, %v394, 0.0
        %v397 = vsel %vm388, %v394, 0.0
        %vm398 = vcmp.eq.s32.totalorder %v270, 1
        %v399 = vsel %vm398, 1, 0
        %v400 = vlaneseq
        %v401 = vshrl.u32 %v400, 7
        %v402 = vsub.s32 0, %v401
        %v403 = vrot.slane %v399, %v402
        %v404 = vlaneseq
        %v405 = vshrl.u32 %v404, 7
        %v406 = vsub.s32 1, %v405
        %v407 = vrot.slane %v399, %v406
        %vm408 = vcmp.eq.s32.totalorder %v403, 1
        %vm409 = vcmp.eq.s32.totalorder %v407, 1
        %v410 = vsel %vm408, %v350, %v389
        %v411 = vsel %vm409, %v352, %v390
        %413 = vset.pattern.permute.xlu0 0
        %414 = vperm.xlu0 %413, %v373
        %v415 = vpop.permute.xlu0 %414
        %v417 = vsel %vm408, %v415, %v396
        %v418 = vsel %vm409, %v415, %v397
        %vm419 = vcmp.eq.s32.totalorder %v270, 2
        %v420 = vsel %vm419, 1, 0
        %v421 = vlaneseq
        %v422 = vshrl.u32 %v421, 7
        %v423 = vsub.s32 0, %v422
        %v424 = vrot.slane %v420, %v423
        %v425 = vlaneseq
        %v426 = vshrl.u32 %v425, 7
        %v427 = vsub.s32 1, %v426
        %v428 = vrot.slane %v420, %v427
        %vm429 = vcmp.eq.s32.totalorder %v424, 1
        %vm430 = vcmp.eq.s32.totalorder %v428, 1
        %v431 = vsel %vm429, %v356, %v410
        %v432 = vsel %vm430, %v358, %v411
        %434 = vset.pattern.permute.xlu0 0
        %435 = vperm.xlu0 %434, %v374
        %v436 = vpop.permute.xlu0 %435
        %v438 = vsel %vm429, %v436, %v417
        %v439 = vsel %vm430, %v436, %v418
        %vm440 = vcmp.eq.s32.totalorder %v270, 3
        %v441 = vsel %vm440, 1, 0
        %v442 = vlaneseq
        %v443 = vshrl.u32 %v442, 7
        %v444 = vsub.s32 0, %v443
        %v445 = vrot.slane %v441, %v444
        %v446 = vlaneseq
        %v447 = vshrl.u32 %v446, 7
        %v448 = vsub.s32 1, %v447
        %v449 = vrot.slane %v441, %v448
        %vm450 = vcmp.eq.s32.totalorder %v445, 1
        %vm451 = vcmp.eq.s32.totalorder %v449, 1
        %v452 = vsel %vm450, %v360, %v431
        %v453 = vsel %vm451, %v362, %v432
        %455 = vset.pattern.permute.xlu0 0
        %456 = vperm.xlu0 %455, %v375
        %v457 = vpop.permute.xlu0 %456
        %v459 = vsel %vm450, %v457, %v438
        %v460 = vsel %vm451, %v457, %v439
        %vm461 = vcmp.eq.s32.totalorder %v270, 4
        %v462 = vsel %vm461, 1, 0
        %v463 = vlaneseq
        %v464 = vshrl.u32 %v463, 7
        %v465 = vsub.s32 0, %v464
        %v466 = vrot.slane %v462, %v465
        %v467 = vlaneseq
        %v468 = vshrl.u32 %v467, 7
        %v469 = vsub.s32 1, %v468
        %v470 = vrot.slane %v462, %v469
        %vm471 = vcmp.eq.s32.totalorder %v466, 1
        %vm472 = vcmp.eq.s32.totalorder %v470, 1
        %v473 = vsel %vm471, %v366, %v452
        %v474 = vsel %vm472, %v368, %v453
        %476 = vset.pattern.permute.xlu0 0
        %477 = vperm.xlu0 %476, %v376
        %v478 = vpop.permute.xlu0 %477
        %v480 = vsel %vm471, %v478, %v459
        %v481 = vsel %vm472, %v478, %v460
        %v482 = vadd.f32 %v473, %v480
        %v483 = vadd.f32 %v474, %v481
        %v484 = vmax.f32 %v482, 0.0
        %v485 = vmax.f32 %v483, 0.0
        %v488 = vcombine.low %v484, %v485
        %490 = vst [vmem:[%s257] sm:$0xff] %v488
        %s491 = sand.u32 %s141, 1
        %s492 = scalar_lea.sflag [#allocation4], %s491
        %s493 = sand.u32 %s141, 1
        %s494 = smul.addr %s493, 8
        %s495 = scalar_lea.vmem [#allocation5], %s494
        // Predicated region
        $region41: #{tpu_custom_call.1} parent=35 // pred_check
          %p496 = pneg %p151
        $region42: #{tpu_custom_call.1} parent=35 // pred_check_branch
          %498 = sbr.rel (%p496) target = $region44
        $region43: #{tpu_custom_call.1} parent=35 // pred_region
          %s499 = smul.u32 2, %s26
          %s501 = ssub.s32 128, 128
          %502 = vsyncadd %s492, %s501
          %s503 = smul.addr %s25, 2
          %s504 = sadd.s32 %s499, %s503
          %s505 = smul.addr %s504, 64
          %s506 = scalar_lea.hbm %s4, %s505
          %s508 = sshll.u32 %s495, 4
          %s509 = int_to_ptr.vmem [resolvable:$true] %s508
          %511 = dma.vmem_to_hbm [thread:$0]  %s509, 128, %s506, %s492
        $region44: #{tpu_custom_call.1} parent=35 // pred_fallthru
          _
      $region36: #{tpu_custom_call.1} parent=5 // pred_fallthru
        _
      %p512 = scmp.le.s32.totalorder 2, %s16
      // Predicated region
      $region45: #{tpu_custom_call.1} parent=5 // pred_check
        %p513 = pneg %p512
      $region46: #{tpu_custom_call.1} parent=5 // pred_check_branch
        %515 = sbr.rel (%p513) target = $region48
      $region47: #{tpu_custom_call.1} parent=5 // pred_region
        %s516 = ssub.s32 %s16, 2
        // Predicated region
        $region49: #{tpu_custom_call.1} parent=47 // pred_check
          %p517 = pneg %p157
        $region50: #{tpu_custom_call.1} parent=47 // pred_check_branch
          %519 = sbr.rel (%p517) target = $region52
        $region51: #{tpu_custom_call.1} parent=47 // pred_region
          %s520 = sand.u32 %s142, 1
          %s521 = scalar_lea.sflag [#allocation4], %s520
          %s522 = sand.u32 %s142, 1
          %s523 = smul.addr %s522, 8
          %s524 = scalar_lea.vmem [#allocation5], %s523
          %525 = dma.done %s521, 128
        $region52: #{tpu_custom_call.1} parent=47 // pred_fallthru
          _
      $region48: #{tpu_custom_call.1} parent=5 // pred_fallthru
        _
    $region6: #{tpu_custom_call.1} parent=1 // loop_footer
      %s20 = sadd.s32 1, %s16
    $region7: #{tpu_custom_call.1} parent=1 // loop_footer_branch
      %15 = sbr.rel target = $region3
    $region8: #{tpu_custom_call.1} parent=1 // loop_exit
      _
    %526 = vsyncpa [#allocation3], 1
    %s527 = scalar_lea.sflag [#allocation3], 1
    %528 = vsyncpa %s527, 1
    %529 = vsyncpa [#allocation4], 1
    %s530 = scalar_lea.sflag [#allocation4], 1
    %531 = vsyncpa %s530, 1

</llo_original>
